<compile_context>
chip_gen: v6e
topology: v6e:2x2x1
jax: 0.10.0
libtpu: 0.0.40
codegen_flags: <defaults>
</compile_context>

<pallas_src>
import math

import jax
import jax.numpy as jnp
import numpy as np
from jax.experimental import pallas as pl
from jax.experimental.pallas import tpu as pltpu


# --------------------------------------------------------------------------
# Gaussian taps (exact reproduction of the PyTorch module's construction)
# --------------------------------------------------------------------------
def _gaussian_1d(kernel_size: int, sigma: float) -> np.ndarray:
    coords = np.arange(kernel_size, dtype=np.float32)
    mean = (kernel_size - 1) / 2.0
    g = (1.0 / (sigma * math.sqrt(2.0 * math.pi))) * np.exp(
        -(((coords - mean) / (2.0 * sigma)) ** 2)
    )
    return np.asarray(g, dtype=np.float32)


def _gaussian_kernel_2d(kernel_size: int, sigma: float) -> np.ndarray:
    g = _gaussian_1d(kernel_size, sigma)
    k2d = np.outer(g, g)
    return (k2d / k2d.sum()).astype(np.float32)


# --------------------------------------------------------------------------
# Kernel body
# --------------------------------------------------------------------------
def _make_kernel(taps, ppb: int, H: int, W: int, H_out: int, W_out: int):
    """Separable blur over `ppb` stacked planes; writes the cropped output."""
    K = len(taps)
    rows = ppb * H
    symmetric = bool(np.allclose(taps, taps[::-1]))

    def _sep_pass(x, axis, size):
        # shifted[j][p] == x[p + j] along `axis` (circular).  The wrap only
        # lands in the last K-1 rows/cols of each plane, which are cropped.
        shifted = [x if j == 0 else pltpu.roll(x, size - j, axis) for j in range(K)]
        if symmetric:
            terms = [taps[j] * (shifted[j] + shifted[K - 1 - j]) for j in range(K // 2)]
            if K % 2:
                terms.append(taps[K // 2] * shifted[K // 2])
        else:
            terms = [taps[j] * shifted[j] for j in range(K)]
        out = terms[0]
        for t in terms[1:]:
            out = out + t
        return out

    def kernel(x_ref, o_ref):
        # x_ref: (ppb, H, W) block of planes; o_ref: (ppb, H_out, W_out).
        x = x_ref[...].astype(jnp.float32).reshape(rows, W)
        h = _sep_pass(x, axis=1, size=W)       # horizontal (lane) pass
        v = _sep_pass(h, axis=0, size=rows)    # vertical (sublane) pass
        out = v.reshape(ppb, H, W)[:, :H_out, :W_out]   # fused 'valid' crop
        o_ref[...] = out.astype(o_ref.dtype)

    return kernel


# --------------------------------------------------------------------------
# Tiling heuristics
# --------------------------------------------------------------------------
def _round_up(a: int, b: int) -> int:
    return -(-a // b) * b


def _sublane_tile(dtype) -> int:
    return {4: 8, 2: 16, 1: 32}.get(jnp.dtype(dtype).itemsize, 8)


def _vmem_limit_bytes() -> int:
    cap = 64 * 1024 * 1024  # conservative default (v7x per-core VMEM)
    try:
        info = pltpu.get_tpu_info()
        cap = int(getattr(info, "vmem_capacity_bytes", cap) or cap)
    except Exception:
        pass
    # v5e/v6e (128 MiB physical): 64 MiB scoped limit; v7x (64 MiB): 32 MiB.
    return 64 * 1024 * 1024 if cap >= 96 * 1024 * 1024 else 32 * 1024 * 1024


def _planes_per_block(B, H, W, H_out, W_out, dtype, budget_bytes, min_steps=8):
    """Planes per grid step: fit the VMEM budget, prefer >= min_steps steps."""
    isz = jnp.dtype(dtype).itemsize
    sub = _sublane_tile(dtype)
    in_p = _round_up(H, sub) * _round_up(W, 128) * isz
    out_p = _round_up(H_out, sub) * _round_up(W_out, 128) * isz
    f32_p = _round_up(H, 8) * _round_up(W, 128) * 4
    # double-buffered in/out DMA buffers + f32 temporaries (x, h, v, crop)
    per_plane = 2 * in_p + 2 * out_p + 4 * f32_p

    max_ppb = max(1, budget_bytes // per_plane)
    target = B // min_steps if B >= min_steps else 1
    target = int(max(1, min(max_ppb, target, B)))

    # Prefer a nearby divisor of B (no partial tail block); else cdiv tail.
    lo = max(1, (3 * target) // 4)
    for d in range(target, lo - 1, -1):
        if B % d == 0:
            return d
    return target


# --------------------------------------------------------------------------
# Public entry point
# --------------------------------------------------------------------------
def gaussian_smoothing(x: jax.Array, kernel_size: int, sigma: float) -> jax.Array:
    """Depthwise 2-D gaussian conv, 'valid' padding, stride 1. x: (N, C, H, W)."""
    N, C, H, W = x.shape
    K = int(kernel_size)
    assert H >= K and W >= K, "spatial dims must be >= kernel_size for 'valid' conv"
    H_out, W_out = H - K + 1, W - K + 1

    g = _gaussian_1d(K, float(sigma))
    taps = tuple(float(v) for v in (g / g.sum()))   # separable normalized taps

    B = N * C
    x3 = x.reshape(B, H, W)                         # free leading-dim merge

    vmem_limit = _vmem_limit_bytes()
    budget = int(vmem_limit * 0.6)
    ppb = _planes_per_block(B, H, W, H_out, W_out, x.dtype, budget)
    grid = (pl.cdiv(B, ppb),)

    out = pl.pallas_call(
        _make_kernel(taps, ppb, H, W, H_out, W_out),
        out_shape=jax.ShapeDtypeStruct((B, H_out, W_out), x.dtype),
        grid_spec=pltpu.PrefetchScalarGridSpec(
            num_scalar_prefetch=0,
            grid=grid,
            in_specs=[pl.BlockSpec((ppb, H, W), lambda b: (b, 0, 0))],
            out_specs=pl.BlockSpec((ppb, H_out, W_out), lambda b: (b, 0, 0)),
        ),
        compiler_params=pltpu.CompilerParams(
            dimension_semantics=("parallel",),
            vmem_limit_bytes=vmem_limit,
        ),
    )(x3)

    return out.reshape(N, C, H_out, W_out)          # free leading-dim split


# --------------------------------------------------------------------------
# Plain-JAX reference (matches F.conv2d with groups=C, VALID padding)
# --------------------------------------------------------------------------
def _reference(x, kernel2d):
    N, C, H, W = x.shape
    Kk = kernel2d.shape[0]
    w = jnp.broadcast_to(kernel2d[None, None, :, :], (C, 1, Kk, Kk))
    return jax.lax.conv_general_dilated(
        x, w,
        window_strides=(1, 1),
        padding="VALID",
        dimension_numbers=("NCHW", "OIHW", "NCHW"),
        feature_group_count=C,
    )


if __name__ == "__main__":
    # Module config: channels=4, kernel_size=5, sigma=1.5, dim=2
    N, C, H, W = 2, 4, 16, 16
    kernel_size, sigma = 5, 1.5

    key = jax.random.PRNGKey(0)
    x = jax.random.normal(key, (N, C, H, W), dtype=jnp.float32)

    out = gaussian_smoothing(x, kernel_size, sigma)
    out = jax.block_until_ready(out)

    k2d = jnp.asarray(_gaussian_kernel_2d(kernel_size, sigma))
    ref = jax.block_until_ready(_reference(x, k2d))
    np.testing.assert_allclose(np.asarray(out), np.asarray(ref), rtol=1e-5, atol=1e-5)

    print("KERNEL_OK")
</pallas_src>

<mosaic_0001>
module attributes {stable_mosaic.version = 11 : i64} {
  func.func @kernel(%arg0: i32, %arg1: memref<1x16x16xf32, #tpu.memory_space<vmem>>, %arg2: memref<1x12x12xf32, #tpu.memory_space<vmem>>) attributes {dimension_semantics = [#tpu.dimension_semantics<parallel>], iteration_bounds = array<i64: 8>, scalar_prefetch = 0 : i64, scratch_operands = 0 : i64, tpu.core_type = #tpu.core_type<tc>, window_params = [{transform_indices = @transform_0, window_bounds = array<i64: 1, 16, 16>}, {transform_indices = @transform_1, window_bounds = array<i64: 1, 12, 12>}]} {
    %c0 = arith.constant 0 : index
    %c0_0 = arith.constant 0 : index
    %c0_1 = arith.constant 0 : index
    %0 = vector.load %arg1[%c0, %c0_0, %c0_1] : memref<1x16x16xf32, #tpu.memory_space<vmem>>, vector<1x16x16xf32>
    %1 = vector.shape_cast %0 : vector<1x16x16xf32> to vector<16x16xf32>
    %c15_i32 = arith.constant 15 : i32
    %2 = tpu.dynamic_rotate %1 by %c15_i32 dim 1 : vector<16x16xf32>, i32 -> vector<16x16xf32>
    %c14_i32 = arith.constant 14 : i32
    %3 = tpu.dynamic_rotate %1 by %c14_i32 dim 1 : vector<16x16xf32>, i32 -> vector<16x16xf32>
    %c13_i32 = arith.constant 13 : i32
    %4 = tpu.dynamic_rotate %1 by %c13_i32 dim 1 : vector<16x16xf32>, i32 -> vector<16x16xf32>
    %c12_i32 = arith.constant 12 : i32
    %5 = tpu.dynamic_rotate %1 by %c12_i32 dim 1 : vector<16x16xf32>, i32 -> vector<16x16xf32>
    %6 = arith.addf %1, %5 : vector<16x16xf32>
    %cst = arith.constant 0.157459289 : f32
    %7 = vector.broadcast %cst : f32 to vector<16x16xf32>
    %8 = arith.mulf %7, %6 : vector<16x16xf32>
    %9 = arith.addf %2, %4 : vector<16x16xf32>
    %cst_2 = arith.constant 0.219752118 : f32
    %10 = vector.broadcast %cst_2 : f32 to vector<16x16xf32>
    %11 = arith.mulf %10, %9 : vector<16x16xf32>
    %cst_3 = arith.constant 0.245577201 : f32
    %12 = vector.broadcast %cst_3 : f32 to vector<16x16xf32>
    %13 = arith.mulf %12, %3 : vector<16x16xf32>
    %14 = arith.addf %8, %11 : vector<16x16xf32>
    %15 = arith.addf %14, %13 : vector<16x16xf32>
    %c15_i32_4 = arith.constant 15 : i32
    %16 = tpu.dynamic_rotate %15 by %c15_i32_4 dim 0 : vector<16x16xf32>, i32 -> vector<16x16xf32>
    %c14_i32_5 = arith.constant 14 : i32
    %17 = tpu.dynamic_rotate %15 by %c14_i32_5 dim 0 : vector<16x16xf32>, i32 -> vector<16x16xf32>
    %c13_i32_6 = arith.constant 13 : i32
    %18 = tpu.dynamic_rotate %15 by %c13_i32_6 dim 0 : vector<16x16xf32>, i32 -> vector<16x16xf32>
    %c12_i32_7 = arith.constant 12 : i32
    %19 = tpu.dynamic_rotate %15 by %c12_i32_7 dim 0 : vector<16x16xf32>, i32 -> vector<16x16xf32>
    %20 = arith.addf %15, %19 : vector<16x16xf32>
    %cst_8 = arith.constant 0.157459289 : f32
    %21 = vector.broadcast %cst_8 : f32 to vector<16x16xf32>
    %22 = arith.mulf %21, %20 : vector<16x16xf32>
    %23 = arith.addf %16, %18 : vector<16x16xf32>
    %cst_9 = arith.constant 0.219752118 : f32
    %24 = vector.broadcast %cst_9 : f32 to vector<16x16xf32>
    %25 = arith.mulf %24, %23 : vector<16x16xf32>
    %cst_10 = arith.constant 0.245577201 : f32
    %26 = vector.broadcast %cst_10 : f32 to vector<16x16xf32>
    %27 = arith.mulf %26, %17 : vector<16x16xf32>
    %28 = arith.addf %22, %25 : vector<16x16xf32>
    %29 = arith.addf %28, %27 : vector<16x16xf32>
    %30 = vector.shape_cast %29 : vector<16x16xf32> to vector<1x16x16xf32>
    %31 = vector.extract_strided_slice %30 {offsets = [0, 0, 0], sizes = [1, 12, 12], strides = [1, 1, 1]} : vector<1x16x16xf32> to vector<1x12x12xf32>
    %c0_11 = arith.constant 0 : index
    %c0_12 = arith.constant 0 : index
    %c0_13 = arith.constant 0 : index
    %32 = vector.load %arg2[%c0_11, %c0_12, %c0_13] : memref<1x12x12xf32, #tpu.memory_space<vmem>>, vector<1x12x12xf32>
    tpu.vector_store %arg2[%c0_11, %c0_12, %c0_13], %31 {strides = array<i32>} : memref<1x12x12xf32, #tpu.memory_space<vmem>>, vector<1x12x12xf32>,
    return
  }
  func.func @transform_0(%arg0: i32) -> (i32, i32, i32) {
    %c0_i32 = arith.constant 0 : i32
    %c0_i32_0 = arith.constant 0 : i32
    %c0_i32_1 = arith.constant 0 : i32
    return %arg0, %c0_i32, %c0_i32_0 : i32, i32, i32
  }
  func.func @transform_1(%arg0: i32) -> (i32, i32, i32) {
    %c0_i32 = arith.constant 0 : i32
    %c0_i32_0 = arith.constant 0 : i32
    %c0_i32_1 = arith.constant 0 : i32
    return %arg0, %c0_i32, %c0_i32_0 : i32, i32, i32
  }
}

</mosaic_0001>

<llo_original>
// kernel: tpu_custom_call.1
$region0: #{tpu_custom_call.1}
  #allocation0 [shape = 'u32[]', space=smem, size = 0x4, offset = 0x4, fixed_abs, tag = 'smem constant byte address 0x4 - core index']
  #allocation1 [shape = 'u32[144,128]{1,0:T(1,128)}', space=vmem, size = 0x12000, scoped, tag = 'internal scratch']
  %s0 = inlined_call_operand.hbm [shape: f32[8,16,16], index: 0, kind: input, shape index: {}]
  %s1 = inlined_call_operand.vmem [shape: f32[8,12,12], index: 1, kind: output, shape index: {}]
  %s2 = sld [smem:[#allocation0]]
  $region41: #{tpu_custom_call.1} parent=0
    _
  %s4 = ssub.s32 1, %s2
  %s5 = scalar_select 0, %s4, %s2
  $region1: #{tpu_custom_call.1} parent=0
    #allocation2 [shape = 'u8[16384]{0}', space=vmem, size = 0x4000, scoped, tag = 'input window, operand 0']
    #allocation3 [shape = 's32[2]{0}', space=sflag, size = 0x8, scoped, tag = 'scoped memory for tpu_custom_call.1']
    %6 = vsyncpa [#allocation3], 0
    %s7 = scalar_lea.sflag [#allocation3], 1
    %8 = vsyncpa %s7, 0
    loop: start=0, step=1, limit=10
    $region2: #{tpu_custom_call.1} parent=1 // loop_pre_header
      _
    $region3: #{tpu_custom_call.1} parent=1 // loop_header
      %s10 = sphi 0, %s14
      %p11 = scmp.ge.s32.totalorder %s10, 10
      %s20 = sphi 0, %s22
      %s23 = sphi 0, %s20
      %s24 = sphi 0, %s23
      %s40 = sphi 0, %s24
      %s46 = sphi 0, %s48
      %s49 = sphi 0, %s46
      %s50 = sphi 0, %s49
      %s66 = sphi 0, %s50
    $region4: #{tpu_custom_call.1} parent=1 // loop_header_branch
      %13 = sbr.rel (%p11) target = $region8
    $region5: #{tpu_custom_call.1} parent=1 // loop_body
      %s15 = ssub.s32 %s10, 1
      %s16 = ssub.s32 %s10, 2
      %s17 = sadd.s32 %s10, 1
      %s18 = ssub.s32 %s10, %s17
      %p19 = scmp.eq.s32.totalorder %s18, 0
      %s21 = sadd.s32 %s20, 1
      %s22 = scalar_select %p19, %s20, %s21
      %p25 = pneg %p19
      %p26 = scmp.eq.s32.totalorder %s10, 7
      %p27 = por %p25, %p26
      %p28 = scmp.ne.s32.totalorder %s20, %s23
      %p29 = scmp.eq.s32.totalorder %s10, 0
      %p30 = por %p28, %p29
      %p31 = scmp.ne.s32.totalorder %s20, %s23
      %p32 = scmp.eq.s32.totalorder %s15, 7
      %p33 = por %p31, %p32
      %p34 = scmp.ne.s32.totalorder %s23, %s24
      %p35 = scmp.eq.s32.totalorder %s15, 0
      %p36 = por %p34, %p35
      %p37 = scmp.ne.s32.totalorder %s23, %s24
      %p38 = scmp.eq.s32.totalorder %s16, 7
      %p39 = por %p37, %p38
      %p41 = scmp.ne.s32.totalorder %s24, %s40
      %p42 = scmp.eq.s32.totalorder %s16, 0
      %p43 = por %p41, %p42
      %s44 = ssub.s32 %s10, %s17
      %p45 = scmp.eq.s32.totalorder %s44, 0
      %s47 = sadd.s32 %s46, 1
      %s48 = scalar_select %p45, %s46, %s47
      %p51 = pneg %p45
      %p52 = scmp.eq.s32.totalorder %s10, 7
      %p53 = por %p51, %p52
      %p54 = scmp.ne.s32.totalorder %s46, %s49
      %p55 = scmp.eq.s32.totalorder %s10, 0
      %p56 = por %p54, %p55
      %p57 = scmp.ne.s32.totalorder %s46, %s49
      %p58 = scmp.eq.s32.totalorder %s15, 7
      %p59 = por %p57, %p58
      %p60 = scmp.ne.s32.totalorder %s49, %s50
      %p61 = scmp.eq.s32.totalorder %s15, 0
      %p62 = por %p60, %p61
      %p63 = scmp.ne.s32.totalorder %s49, %s50
      %p64 = scmp.eq.s32.totalorder %s16, 7
      %p65 = por %p63, %p64
      %p67 = scmp.ne.s32.totalorder %s50, %s66
      %p68 = scmp.eq.s32.totalorder %s16, 0
      %p69 = por %p67, %p68
      %p70 = scmp.le.s32.totalorder 1, %s10
      %p71 = scmp.lt.s32.totalorder %s10, 9
      %p72 = pnand %p70, %p71
      %p73 = pneg %p72
      // Predicated region
      $region9: #{tpu_custom_call.1} parent=5 // pred_check
        _
      $region10: #{tpu_custom_call.1} parent=5 // pred_check_branch
        %75 = sbr.rel (%p72) target = $region12
      $region11: #{tpu_custom_call.1} parent=5 // pred_region
        %s76 = ssub.s32 %s10, 1
      $region12: #{tpu_custom_call.1} parent=5 // pred_fallthru
        _
      %p77 = scmp.lt.s32.totalorder %s10, 8
      // Predicated region
      $region13: #{tpu_custom_call.1} parent=5 // pred_check
        %p78 = pneg %p77
      $region14: #{tpu_custom_call.1} parent=5 // pred_check_branch
        %80 = sbr.rel (%p78) target = $region16
      $region15: #{tpu_custom_call.1} parent=5 // pred_region
        // Predicated region
        $region17: #{tpu_custom_call.1} parent=15 // pred_check
          %p81 = pneg %p30
        $region18: #{tpu_custom_call.1} parent=15 // pred_check_branch
          %83 = sbr.rel (%p81) target = $region20
        $region19: #{tpu_custom_call.1} parent=15 // pred_region
          %s84 = sand.u32 %s20, 1
          %s85 = scalar_lea.sflag [#allocation3], %s84
          %s86 = sand.u32 %s20, 1
          %s87 = smul.addr %s86, 16
          %s88 = scalar_lea.vmem [#allocation2], %s87
          %s90 = ssub.s32 256, 256
          %91 = vsyncadd %s85, %s90
          %s92 = smul.addr %s10, 2
          %s93 = smul.addr %s92, 128
          %s94 = scalar_lea.hbm %s0, %s93
          %s95 = sshll.u32 %s88, 4
          %s96 = int_to_ptr.vmem [resolvable:$true] %s95
          %101 = dma.hbm_to_vmem [thread:$0]  %s94, 256, %s96, %s85, 128, 128, 8
        $region20: #{tpu_custom_call.1} parent=15 // pred_fallthru
          _
      $region16: #{tpu_custom_call.1} parent=5 // pred_fallthru
        _
      %p102 = scmp.le.s32.totalorder 1, %s10
      %p103 = scmp.lt.s32.totalorder %s10, 9
      %p104 = pnand %p102, %p103
      %p105 = pneg %p104
      // Predicated region
      $region21: #{tpu_custom_call.1} parent=5 // pred_check
        _
      $region22: #{tpu_custom_call.1} parent=5 // pred_check_branch
        %107 = sbr.rel (%p104) target = $region24
      $region23: #{tpu_custom_call.1} parent=5 // pred_region
        %s108 = ssub.s32 %s10, 1
        %s109 = sand.u32 %s23, 1
        %s110 = scalar_lea.sflag [#allocation3], %s109
        %s111 = sand.u32 %s23, 1
        %s112 = smul.addr %s111, 16
        %s113 = scalar_lea.vmem [#allocation2], %s112
        // Predicated region
        $region25: #{tpu_custom_call.1} parent=23 // pred_check
          %p114 = pneg %p36
        $region26: #{tpu_custom_call.1} parent=23 // pred_check_branch
          %116 = sbr.rel (%p114) target = $region28
        $region27: #{tpu_custom_call.1} parent=23 // pred_region
          %117 = dma.done %s110, 256
        $region28: #{tpu_custom_call.1} parent=23 // pred_fallthru
          _
        %s118 = sand.u32 %s23, 1
        %s119 = scalar_lea.sflag [#allocation3], %s118
        %s120 = sand.u32 %s23, 1
        %s121 = smul.addr %s120, 16
        %s122 = scalar_lea.vmem [#allocation2], %s121
        %p123 = pneg %p36
        %p124 = pneg %p33
        %p125 = pneg %p62
        %p126 = pneg %p59
        %p127 = scmp.lt.s32.totalorder %s15, 7
        %s128 = scalar_select %p127, %s15, 7
        %s129 = smul.addr %s128, 2
        %s130 = smul.addr %s129, 8
        %s131 = scalar_lea.vmem %s1, %s130
        %p132 = scmp.lt.s32.totalorder %s15, 7
        %s133 = scalar_select %p132, %s15, 7
        %s134 = smul.addr %s133, 2
        %s135 = smul.addr %s134, 8
        %s136 = scalar_lea.vmem %s1, %s135
        %v137 = vld [vmem:[%s113] sm:$0xff]
        %v138 = vld [vmem:[%s113 + $0x8] sm:$0xff]
        %vm139 = vcmask 1047680
        %140 = vrot.lane.b32.xlu0 %v137, 16
        %v141 = vpop.permute.xlu0 %140
        %v142 = vsel %vm139, %v141, %v137
        %143 = vrot.lane.b32.xlu0 %v138, 16
        %v144 = vpop.permute.xlu0 %143
        %v145 = vsel %vm139, %v144, %v138
        %146 = vrot.lane.b32.xlu0 %v142, 16
        %v147 = vpop.permute.xlu0 %146
        %148 = vrot.lane.b32.xlu0 %v145, 16
        %v149 = vpop.permute.xlu0 %148
        %v150 = vsel %vm139, %v147, %v137
        %v151 = vsel %vm139, %v149, %v138
        %154 = vrot.lane.b32.xlu0 %v150, 124
        %v155 = vpop.permute.xlu0 %154
        %156 = vrot.lane.b32.xlu0 %v151, 124
        %v157 = vpop.permute.xlu0 %156
        %v160 = vadd.f32 %v137, %v155
        %v161 = vadd.f32 %v138, %v157
        %v162 = vmul.f32 %v160, 0.15745929
        %v163 = vmul.f32 %v161, 0.15745929
        %164 = vrot.lane.b32.xlu0 %v150, 126
        %v165 = vpop.permute.xlu0 %164
        %166 = vrot.lane.b32.xlu0 %v151, 126
        %v167 = vpop.permute.xlu0 %166
        %v170 = vadd.f32 %v150, %v165
        %v171 = vadd.f32 %v151, %v167
        %v172 = vmul.f32 %v170, 0.21975212
        %v173 = vmul.f32 %v171, 0.21975212
        %v174 = vmul.f32 %v150, 0.2455772
        %v175 = vmul.f32 %v151, 0.2455772
        %178 = vrot.lane.b32.xlu0 %v172, 127
        %v179 = vpop.permute.xlu0 %178
        %180 = vrot.lane.b32.xlu0 %v173, 127
        %v181 = vpop.permute.xlu0 %180
        %v184 = vadd.f32 %v162, %v179
        %v185 = vadd.f32 %v163, %v181
        %188 = vrot.lane.b32.xlu0 %v174, 126
        %v189 = vpop.permute.xlu0 %188
        %190 = vrot.lane.b32.xlu0 %v175, 126
        %v191 = vpop.permute.xlu0 %190
        %v194 = vadd.f32 %v184, %v189
        %v195 = vadd.f32 %v185, %v191
        %v196 = vrot.slane %v194, 1
        %v197 = vrot.slane %v195, 1
        %v198 = vlaneseq
        %v199 = vshrl.u32 %v198, 7
        %vm200 = vcmp.lt.s32.totalorder %v199, 7
        %v201 = vsel %vm200, %v196, %v197
        %v202 = vsel %vm200, %v197, %v196
        %v203 = vrot.slane %v194, 2
        %v204 = vrot.slane %v195, 2
        %vm205 = vcmp.lt.s32.totalorder %v199, 6
        %v206 = vsel %vm205, %v203, %v204
        %v207 = vsel %vm205, %v204, %v203
        %v208 = vrot.slane %v194, 3
        %v209 = vrot.slane %v195, 3
        %vm210 = vcmp.lt.s32.totalorder %v199, 5
        %v211 = vsel %vm210, %v208, %v209
        %v212 = vsel %vm210, %v209, %v208
        %v213 = vrot.slane %v194, 4
        %v214 = vrot.slane %v195, 4
        %vm215 = vcmp.lt.s32.totalorder %v199, 4
        %v216 = vsel %vm215, %v213, %v214
        %v217 = vsel %vm215, %v214, %v213
        %v218 = vadd.f32 %v194, %v216
        %v219 = vadd.f32 %v195, %v217
        %v220 = vmul.f32 %v218, 0.15745929
        %v221 = vmul.f32 %v219, 0.15745929
        %v222 = vadd.f32 %v201, %v211
        %v223 = vadd.f32 %v202, %v212
        %v224 = vmul.f32 %v222, 0.21975212
        %v225 = vmul.f32 %v223, 0.21975212
        %v226 = vmul.f32 %v206, 0.2455772
        %v227 = vmul.f32 %v207, 0.2455772
        %v228 = vadd.f32 %v220, %v224
        %v229 = vadd.f32 %v221, %v225
        %v230 = vadd.f32 %v228, %v226
        %v231 = vadd.f32 %v229, %v227
        %vm232 = vcmask 97280
        %233 = vst.msk [vmem:[%s136] sm:$0xff] %vm232, %v230
        %vm234 = vcmask 93184
        %235 = vst.msk [vmem:[%s136 + $0x8] sm:$0xf] %vm234, %v231
        %p236 = scmp.lt.s32.totalorder %s15, 7
        %s237 = scalar_select %p236, %s15, 7
        %s238 = smul.addr %s237, 2
        %s239 = smul.addr %s238, 8
        %s240 = scalar_lea.vmem %s1, %s239
        // Predicated region
        $region29: #{tpu_custom_call.1} parent=23 // pred_check
          %p241 = pneg %p59
        $region30: #{tpu_custom_call.1} parent=23 // pred_check_branch
          %243 = sbr.rel (%p241) target = $region32
        $region31: #{tpu_custom_call.1} parent=23 // pred_region
          _
        $region32: #{tpu_custom_call.1} parent=23 // pred_fallthru
          _
      $region24: #{tpu_custom_call.1} parent=5 // pred_fallthru
        _
      %p244 = scmp.le.s32.totalorder 2, %s10
      // Predicated region
      $region33: #{tpu_custom_call.1} parent=5 // pred_check
        %p245 = pneg %p244
      $region34: #{tpu_custom_call.1} parent=5 // pred_check_branch
        %247 = sbr.rel (%p245) target = $region36
      $region35: #{tpu_custom_call.1} parent=5 // pred_region
        %s248 = ssub.s32 %s10, 2
        // Predicated region
        $region37: #{tpu_custom_call.1} parent=35 // pred_check
          %p249 = pneg %p65
        $region38: #{tpu_custom_call.1} parent=35 // pred_check_branch
          %251 = sbr.rel (%p249) target = $region40
        $region39: #{tpu_custom_call.1} parent=35 // pred_region
          %p252 = scmp.lt.s32.totalorder %s16, 7
          %s253 = scalar_select %p252, %s16, 7
          %s254 = smul.addr %s253, 2
          %s255 = smul.addr %s254, 8
          %s256 = scalar_lea.vmem %s1, %s255
        $region40: #{tpu_custom_call.1} parent=35 // pred_fallthru
          _
      $region36: #{tpu_custom_call.1} parent=5 // pred_fallthru
        _
    $region6: #{tpu_custom_call.1} parent=1 // loop_footer
      %s14 = sadd.s32 1, %s10
    $region7: #{tpu_custom_call.1} parent=1 // loop_footer_branch
      %9 = sbr.rel target = $region3
    $region8: #{tpu_custom_call.1} parent=1 // loop_exit
      _
    %257 = vsyncpa [#allocation3], 1
    %s258 = scalar_lea.sflag [#allocation3], 1
    %259 = vsyncpa %s258, 1

</llo_original>
